<compile_context>
chip_gen: v5e
topology: v5e:2x2
jax: 0.10.0
libtpu: 0.0.40
codegen_flags: <defaults>
</compile_context>

<pallas_src>
import functools

import jax
import jax.numpy as jnp
from jax.experimental import pallas as pl
from jax.experimental.pallas import tpu as pltpu


def net_kernel(x_ref, wconv_ref, smallf_ref, wa_ref, win_ref, wres_ref,
               smallh_ref, woutT_ref, bout_ref, out_ref, *, tb, l_out, l_pad):
    f = wconv_ref.shape[-1]                 # num_filters

    bconv = smallf_ref[0:1, :]              # [1, F]
    ba = smallf_ref[1:2, :]                 # [1, F]
    va = smallf_ref[2:3, :].reshape(1, 1, f)  # [1, 1, F]

    # ---- Conv1d (valid, stride 1) as one im2col matmul + tanh --------------
    # x_ref is already 2-D [TB*l_pad, K*C_in] (flattened in the wrapper).
    h2 = jnp.tanh(jnp.dot(x_ref[...], wconv_ref[...],
                          preferred_element_type=jnp.float32) + bconv)   # [M,F] f32

    # ---- Additive attention: projection on the MXU, score on the VPU -------
    t2 = jnp.tanh(jnp.dot(h2.astype(jnp.bfloat16), wa_ref[...],
                          preferred_element_type=jnp.float32) + ba)      # [M,F] f32

    # l_pad is a multiple of 8, so these reshapes are free (no relayout).
    h3 = h2.reshape(tb, l_pad, f)
    t3 = t2.reshape(tb, l_pad, f)

    e = jnp.sum(t3 * va, axis=-1, keepdims=True)                         # [TB,Lp,1]
    pos = jax.lax.broadcasted_iota(jnp.int32, (l_pad, 1), 0).reshape(1, l_pad, 1)
    e = jnp.where(pos < l_out, e, -1e30)          # mask the padded positions
    mmax = jnp.max(e, axis=1, keepdims=True)                             # [TB,1,1]
    p = jnp.exp(e - mmax)
    denom = jnp.sum(p, axis=1, keepdims=True)
    alpha = p * pl.reciprocal(denom, approx=True)  # softmax over the sequence (EUP)
    ctx = jnp.sum(alpha * h3, axis=1)                                    # [TB,F]

    # ---- Residual MLP (hidden zero-padded to HP; padding is exact) ---------
    bin_row = smallh_ref[0:1, :]
    r = jnp.maximum(jnp.dot(ctx.astype(jnp.bfloat16), win_ref[...],
                            preferred_element_type=jnp.float32) + bin_row, 0.0)
    n_blocks = wres_ref.shape[0]
    for i in range(n_blocks):                     # static 7 residual blocks
        r = r + jnp.maximum(
            jnp.dot(r.astype(jnp.bfloat16), wres_ref[i],
                    preferred_element_type=jnp.float32)
            + smallh_ref[i + 1:i + 2, :], 0.0)

    # ---- Final Linear H -> out_dim (out_dim tiny) off the MXU ---------------
    out_dim = woutT_ref.shape[0]
    cols = [jnp.sum(r * woutT_ref[j:j + 1, :], axis=-1, keepdims=True)
            for j in range(out_dim)]
    out_ref[...] = jnp.concatenate(cols, axis=-1) + bout_ref[...]


def net_forward(traj, params, *, kernel_size, block_b=256):
    """traj: [B, L, C_in] (channels-last; transpose PyTorch's [B, C_in, L])."""
    B, L, C_in = traj.shape
    l_out = L - kernel_size + 1
    l_pad = ((l_out + 7) // 8) * 8          # sublane-align the sequence axis
    kc = kernel_size * C_in
    F = params["wconv"].shape[2]
    out_dim = params["wout"].shape[1]
    n_blocks = params["wres"].shape[0]

    # ---- batch tiling (on v7x choose block_b <= ceil(B/2) to use both TCs) --
    TB = min(block_b, B)
    if TB < B:
        TB = ((TB + 7) // 8) * 8
    n_tiles = pl.cdiv(B, TB)
    B_pad = n_tiles * TB
    if B_pad != B:
        traj = jnp.pad(traj, ((0, B_pad - B), (0, 0), (0, 0)))

    # ---- im2col + sequence padding + 2-D flatten, all wrapper-side ----------
    x = jnp.concatenate([traj[:, dk:dk + l_out, :] for dk in range(kernel_size)],
                        axis=-1)                               # [B_pad, l_out, K*C]
    x = jnp.pad(x, ((0, 0), (0, l_pad - l_out), (0, 0)))       # [B_pad, l_pad, K*C]
    x2d = x.reshape(B_pad * l_pad, kc).astype(jnp.bfloat16)

    # ---- weights: bf16 matmul operands, small biases consolidated -----------
    wconv = params["wconv"].reshape(kc, F).astype(jnp.bfloat16)
    wa = params["wa"].astype(jnp.bfloat16)

    H = params["win"].shape[1]
    HP = 64 if H <= 64 else ((H + 7) // 8) * 8   # zero-pad hidden (exact)

    def padax(a, axis, new):
        pads = [(0, 0)] * a.ndim
        pads[axis] = (0, new - a.shape[axis])
        return jnp.pad(a, pads)

    win = padax(params["win"], 1, HP).astype(jnp.bfloat16)               # [F, HP]
    wres = padax(padax(params["wres"], 1, HP), 2, HP).astype(jnp.bfloat16)  # [n,HP,HP]
    woutT = padax(params["wout"].T, 1, HP).astype(jnp.float32)           # [out, HP]

    small_f = jnp.concatenate(
        [params["bconv"], params["ba"], params["va"].reshape(1, F)],
        axis=0).astype(jnp.float32)                                      # [3, F]
    small_h = jnp.concatenate(
        [padax(params["bin"], 1, HP),
         padax(params["bres"], 2, HP).reshape(n_blocks, HP)],
        axis=0).astype(jnp.float32)                                      # [1+n, HP]
    bout = params["bout"].astype(jnp.float32)                            # [1, out]

    weights = [wconv, small_f, wa, win, wres, small_h, woutT, bout]

    def weight_spec(w):
        return pl.BlockSpec(w.shape, lambda b: (0,) * w.ndim)

    kernel = functools.partial(net_kernel, tb=TB, l_out=l_out, l_pad=l_pad)

    out = pl.pallas_call(
        kernel,
        out_shape=jax.ShapeDtypeStruct((B_pad, out_dim), jnp.float32),
        grid_spec=pltpu.PrefetchScalarGridSpec(
            num_scalar_prefetch=0,
            grid=(n_tiles,),
            in_specs=[pl.BlockSpec((TB * l_pad, kc), lambda b: (b, 0))]
                     + [weight_spec(w) for w in weights],
            out_specs=pl.BlockSpec((TB, out_dim), lambda b: (b, 0)),
        ),
        compiler_params=pltpu.CompilerParams(
            dimension_semantics=("parallel",),
            vmem_limit_bytes=(64 << 20) if TB > 512 else None),
    )(x2d, *weights)
    return out[:B]


def init_params(key, *, c_in, kernel_size, num_filters, hidden, n_blocks, out_dim):
    ks = jax.random.split(key, 11)
    s = 0.1
    return {
        "wconv": s * jax.random.normal(ks[0], (kernel_size, c_in, num_filters), jnp.float32),
        "bconv": s * jax.random.normal(ks[1], (1, num_filters), jnp.float32),
        "wa":    s * jax.random.normal(ks[2], (num_filters, num_filters), jnp.float32),
        "ba":    s * jax.random.normal(ks[3], (1, num_filters), jnp.float32),
        "va":    s * jax.random.normal(ks[4], (num_filters, 1), jnp.float32),
        "win":   s * jax.random.normal(ks[5], (num_filters, hidden), jnp.float32),
        "bin":   s * jax.random.normal(ks[6], (1, hidden), jnp.float32),
        "wres":  s * jax.random.normal(ks[7], (n_blocks, hidden, hidden), jnp.float32),
        "bres":  s * jax.random.normal(ks[8], (n_blocks, 1, hidden), jnp.float32),
        "wout":  s * jax.random.normal(ks[9], (hidden, out_dim), jnp.float32),
        "bout":  s * jax.random.normal(ks[10], (1, out_dim), jnp.float32),
    }


def forward_ref(traj, p, *, kernel_size):
    """Pure-JAX f32 reference for verification (unpadded weights)."""
    B, L, C = traj.shape
    l_out = L - kernel_size + 1
    F = p["wconv"].shape[2]
    acc = jnp.zeros((B, l_out, F), jnp.float32)
    for dk in range(kernel_size):
        acc = acc + jnp.einsum("blc,cf->blf", traj[:, dk:dk + l_out, :], p["wconv"][dk])
    h = jnp.tanh(acc + p["bconv"])
    e = jnp.einsum("blf,fo->blo",
                   jnp.tanh(jnp.einsum("blf,fg->blg", h, p["wa"]) + p["ba"]),
                   p["va"])
    alpha = jax.nn.softmax(e, axis=1)
    ctx = jnp.sum(alpha * h, axis=1)
    r = jax.nn.relu(ctx @ p["win"] + p["bin"])
    for i in range(p["wres"].shape[0]):
        r = r + jax.nn.relu(r @ p["wres"][i] + p["bres"][i])
    return r @ p["wout"] + p["bout"]


if __name__ == "__main__":
    # Small shapes consistent with the module: Net(kernel_size=3, num_filters=32)
    B, L, C_in = 2, 16, 4
    KERNEL_SIZE, NUM_FILTERS, HIDDEN, N_BLOCKS, OUT_DIM = 3, 32, 50, 7, 2

    key = jax.random.PRNGKey(0)
    k_x, k_p = jax.random.split(key)
    traj = jax.random.normal(k_x, (B, L, C_in), jnp.float32)   # layout: [B, L, C_in]
    params = init_params(k_p, c_in=C_in, kernel_size=KERNEL_SIZE,
                         num_filters=NUM_FILTERS, hidden=HIDDEN,
                         n_blocks=N_BLOCKS, out_dim=OUT_DIM)

    out = net_forward(traj, params, kernel_size=KERNEL_SIZE)
    out = jax.block_until_ready(out)

    ref = forward_ref(traj, params, kernel_size=KERNEL_SIZE)
    assert out.shape == (B, OUT_DIM)
    # Tolerance accounts for bf16 matmul operands (f32 accumulation) and the
    # EUP approx reciprocal in the softmax denominator.
    assert jnp.allclose(out, ref, rtol=5e-2, atol=5e-2), (out, ref)

    print("KERNEL_OK")
</pallas_src>

<mosaic_0001>
module attributes {stable_mosaic.version = 11 : i64} {
  func.func @net_kernel(%arg0: i32, %arg1: memref<32x12xbf16, #tpu.memory_space<vmem>>, %arg2: memref<12x32xbf16, #tpu.memory_space<vmem>>, %arg3: memref<3x32xf32, #tpu.memory_space<vmem>>, %arg4: memref<32x32xbf16, #tpu.memory_space<vmem>>, %arg5: memref<32x64xbf16, #tpu.memory_space<vmem>>, %arg6: memref<7x64x64xbf16, #tpu.memory_space<vmem>>, %arg7: memref<8x64xf32, #tpu.memory_space<vmem>>, %arg8: memref<2x64xf32, #tpu.memory_space<vmem>>, %arg9: memref<1x2xf32, #tpu.memory_space<vmem>>, %arg10: memref<2x2xf32, #tpu.memory_space<vmem>>) attributes {dimension_semantics = [#tpu.dimension_semantics<parallel>], iteration_bounds = array<i64: 1>, scalar_prefetch = 0 : i64, scratch_operands = 0 : i64, tpu.core_type = #tpu.core_type<tc>, window_params = [{transform_indices = @transform_0, window_bounds = array<i64: 32, 12>}, {pipeline_mode = #tpu.pipeline_mode<synchronous>, transform_indices = @transform_1, window_bounds = array<i64: 12, 32>}, {pipeline_mode = #tpu.pipeline_mode<synchronous>, transform_indices = @transform_2, window_bounds = array<i64: 3, 32>}, {pipeline_mode = #tpu.pipeline_mode<synchronous>, transform_indices = @transform_3, window_bounds = array<i64: 32, 32>}, {pipeline_mode = #tpu.pipeline_mode<synchronous>, transform_indices = @transform_4, window_bounds = array<i64: 32, 64>}, {pipeline_mode = #tpu.pipeline_mode<synchronous>, transform_indices = @transform_5, window_bounds = array<i64: 7, 64, 64>}, {pipeline_mode = #tpu.pipeline_mode<synchronous>, transform_indices = @transform_6, window_bounds = array<i64: 8, 64>}, {pipeline_mode = #tpu.pipeline_mode<synchronous>, transform_indices = @transform_7, window_bounds = array<i64: 2, 64>}, {pipeline_mode = #tpu.pipeline_mode<synchronous>, transform_indices = @transform_8, window_bounds = array<i64: 1, 2>}, {transform_indices = @transform_9, window_bounds = array<i64: 2, 2>}]} {
    %c0 = arith.constant 0 : index
    %c0_0 = arith.constant 0 : index
    %0 = vector.load %arg3[%c0, %c0_0] : memref<3x32xf32, #tpu.memory_space<vmem>>, vector<1x32xf32>
    %c1 = arith.constant 1 : index
    %c0_1 = arith.constant 0 : index
    %1 = vector.load %arg3[%c1, %c0_1] : memref<3x32xf32, #tpu.memory_space<vmem>>, vector<1x32xf32>
    %c2 = arith.constant 2 : index
    %c0_2 = arith.constant 0 : index
    %2 = vector.load %arg3[%c2, %c0_2] : memref<3x32xf32, #tpu.memory_space<vmem>>, vector<1x32xf32>
    %3 = vector.shape_cast %2 : vector<1x32xf32> to vector<1x1x32xf32>
    %c0_3 = arith.constant 0 : index
    %c0_4 = arith.constant 0 : index
    %4 = vector.load %arg1[%c0_3, %c0_4] : memref<32x12xbf16, #tpu.memory_space<vmem>>, vector<32x12xbf16>
    %c0_5 = arith.constant 0 : index
    %c0_6 = arith.constant 0 : index
    %5 = vector.load %arg2[%c0_5, %c0_6] : memref<12x32xbf16, #tpu.memory_space<vmem>>, vector<12x32xbf16>
    %cst = arith.constant dense<0.000000e+00> : vector<32x32xf32>
    %6 = tpu.matmul %4, %5, %cst {dimension_numbers = #tpu.dot_dimension_numbers<[1], [0], [0], [1], [0, 0, 1, 1], [], []>} : vector<32x12xbf16>, vector<12x32xbf16>, vector<32x32xf32> -> vector<32x32xf32>
    %7 = vector.broadcast %0 : vector<1x32xf32> to vector<32x32xf32>
    %8 = arith.addf %6, %7 : vector<32x32xf32>
    %9 = math.tanh %8 : vector<32x32xf32>
    %10 = arith.truncf %9 : vector<32x32xf32> to vector<32x32xbf16>
    %c0_7 = arith.constant 0 : index
    %c0_8 = arith.constant 0 : index
    %11 = vector.load %arg4[%c0_7, %c0_8] : memref<32x32xbf16, #tpu.memory_space<vmem>>, vector<32x32xbf16>
    %cst_9 = arith.constant dense<0.000000e+00> : vector<32x32xf32>
    %12 = tpu.matmul %10, %11, %cst_9 {dimension_numbers = #tpu.dot_dimension_numbers<[1], [0], [0], [1], [0, 0, 1, 1], [], []>} : vector<32x32xbf16>, vector<32x32xbf16>, vector<32x32xf32> -> vector<32x32xf32>
    %13 = vector.broadcast %1 : vector<1x32xf32> to vector<32x32xf32>
    %14 = arith.addf %12, %13 : vector<32x32xf32>
    %15 = math.tanh %14 : vector<32x32xf32>
    %16 = vector.shape_cast %9 : vector<32x32xf32> to vector<2x16x32xf32>
    %17 = vector.shape_cast %15 : vector<32x32xf32> to vector<2x16x32xf32>
    %18 = vector.broadcast %3 : vector<1x1x32xf32> to vector<2x16x32xf32>
    %19 = arith.mulf %17, %18 : vector<2x16x32xf32>
    %cst_10 = arith.constant dense<0.000000e+00> : vector<2x16xf32>
    %20 = vector.multi_reduction <add>, %19, %cst_10 [2] : vector<2x16x32xf32> to vector<2x16xf32>
    %21 = vector.shape_cast %20 : vector<2x16xf32> to vector<2x16x1xf32>
    %22 = tpu.iota {dimensions = array<i32: 0>} : vector<16x1xi32>
    %23 = vector.shape_cast %22 : vector<16x1xi32> to vector<1x16x1xi32>
    %c14_i32 = arith.constant 14 : i32
    %24 = vector.broadcast %c14_i32 : i32 to vector<1x16x1xi32>
    %25 = arith.cmpi slt, %23, %24 : vector<1x16x1xi32>
    %cst_11 = arith.constant -1.000000e+30 : f32
    %26 = vector.shape_cast %25 : vector<1x16x1xi1> to vector<1x16x1xi1>
    %27 = vector.broadcast %26 : vector<1x16x1xi1> to vector<2x16x1xi1>
    %28 = vector.broadcast %cst_11 : f32 to vector<2x16x1xf32>
    %29 = arith.select %27, %21, %28 : vector<2x16x1xi1>, vector<2x16x1xf32>
    %cst_12 = arith.constant dense<0xFF800000> : vector<2x1xf32>
    %30 = vector.multi_reduction <maximumf>, %29, %cst_12 [1] : vector<2x16x1xf32> to vector<2x1xf32>
    %31 = vector.shape_cast %30 : vector<2x1xf32> to vector<2x1x1xf32>
    %32 = vector.broadcast %31 : vector<2x1x1xf32> to vector<2x16x1xf32>
    %33 = arith.subf %29, %32 : vector<2x16x1xf32>
    %34 = math.exp %33 : vector<2x16x1xf32>
    %cst_13 = arith.constant dense<0.000000e+00> : vector<2x1xf32>
    %35 = vector.multi_reduction <add>, %34, %cst_13 [1] : vector<2x16x1xf32> to vector<2x1xf32>
    %36 = vector.shape_cast %35 : vector<2x1xf32> to vector<2x1x1xf32>
    %37 = tpu.reciprocal %36 {approx = true} : vector<2x1x1xf32> -> vector<2x1x1xf32>
    %38 = vector.broadcast %37 : vector<2x1x1xf32> to vector<2x16x1xf32>
    %39 = arith.mulf %34, %38 : vector<2x16x1xf32>
    %40 = vector.broadcast %39 : vector<2x16x1xf32> to vector<2x16x32xf32>
    %41 = arith.mulf %40, %16 : vector<2x16x32xf32>
    %cst_14 = arith.constant dense<0.000000e+00> : vector<2x32xf32>
    %42 = vector.multi_reduction <add>, %41, %cst_14 [1] : vector<2x16x32xf32> to vector<2x32xf32>
    %c0_15 = arith.constant 0 : index
    %c0_16 = arith.constant 0 : index
    %43 = vector.load %arg7[%c0_15, %c0_16] : memref<8x64xf32, #tpu.memory_space<vmem>>, vector<1x64xf32>
    %44 = arith.truncf %42 : vector<2x32xf32> to vector<2x32xbf16>
    %c0_17 = arith.constant 0 : index
    %c0_18 = arith.constant 0 : index
    %45 = vector.load %arg5[%c0_17, %c0_18] : memref<32x64xbf16, #tpu.memory_space<vmem>>, vector<32x64xbf16>
    %cst_19 = arith.constant dense<0.000000e+00> : vector<2x64xf32>
    %46 = tpu.matmul %44, %45, %cst_19 {dimension_numbers = #tpu.dot_dimension_numbers<[1], [0], [0], [1], [0, 0, 1, 1], [], []>} : vector<2x32xbf16>, vector<32x64xbf16>, vector<2x64xf32> -> vector<2x64xf32>
    %47 = vector.broadcast %43 : vector<1x64xf32> to vector<2x64xf32>
    %48 = arith.addf %46, %47 : vector<2x64xf32>
    %cst_20 = arith.constant 0.000000e+00 : f32
    %49 = vector.broadcast %cst_20 : f32 to vector<2x64xf32>
    %50 = arith.maximumf %48, %49 : vector<2x64xf32>
    %51 = arith.truncf %50 : vector<2x64xf32> to vector<2x64xbf16>
    %c0_21 = arith.constant 0 : index
    %c0_22 = arith.constant 0 : index
    %c0_23 = arith.constant 0 : index
    %52 = vector.load %arg6[%c0_21, %c0_22, %c0_23] : memref<7x64x64xbf16, #tpu.memory_space<vmem>>, vector<1x64x64xbf16>
    %53 = vector.shape_cast %52 : vector<1x64x64xbf16> to vector<64x64xbf16>
    %cst_24 = arith.constant dense<0.000000e+00> : vector<2x64xf32>
    %54 = tpu.matmul %51, %53, %cst_24 {dimension_numbers = #tpu.dot_dimension_numbers<[1], [0], [0], [1], [0, 0, 1, 1], [], []>} : vector<2x64xbf16>, vector<64x64xbf16>, vector<2x64xf32> -> vector<2x64xf32>
    %c1_25 = arith.constant 1 : index
    %c0_26 = arith.constant 0 : index
    %55 = vector.load %arg7[%c1_25, %c0_26] : memref<8x64xf32, #tpu.memory_space<vmem>>, vector<1x64xf32>
    %56 = vector.broadcast %55 : vector<1x64xf32> to vector<2x64xf32>
    %57 = arith.addf %54, %56 : vector<2x64xf32>
    %cst_27 = arith.constant 0.000000e+00 : f32
    %58 = vector.broadcast %cst_27 : f32 to vector<2x64xf32>
    %59 = arith.maximumf %57, %58 : vector<2x64xf32>
    %60 = arith.addf %50, %59 : vector<2x64xf32>
    %61 = arith.truncf %60 : vector<2x64xf32> to vector<2x64xbf16>
    %c1_28 = arith.constant 1 : index
    %c0_29 = arith.constant 0 : index
    %c0_30 = arith.constant 0 : index
    %62 = vector.load %arg6[%c1_28, %c0_29, %c0_30] : memref<7x64x64xbf16, #tpu.memory_space<vmem>>, vector<1x64x64xbf16>
    %63 = vector.shape_cast %62 : vector<1x64x64xbf16> to vector<64x64xbf16>
    %cst_31 = arith.constant dense<0.000000e+00> : vector<2x64xf32>
    %64 = tpu.matmul %61, %63, %cst_31 {dimension_numbers = #tpu.dot_dimension_numbers<[1], [0], [0], [1], [0, 0, 1, 1], [], []>} : vector<2x64xbf16>, vector<64x64xbf16>, vector<2x64xf32> -> vector<2x64xf32>
    %c2_32 = arith.constant 2 : index
    %c0_33 = arith.constant 0 : index
    %65 = vector.load %arg7[%c2_32, %c0_33] : memref<8x64xf32, #tpu.memory_space<vmem>>, vector<1x64xf32>
    %66 = vector.broadcast %65 : vector<1x64xf32> to vector<2x64xf32>
    %67 = arith.addf %64, %66 : vector<2x64xf32>
    %cst_34 = arith.constant 0.000000e+00 : f32
    %68 = vector.broadcast %cst_34 : f32 to vector<2x64xf32>
    %69 = arith.maximumf %67, %68 : vector<2x64xf32>
    %70 = arith.addf %60, %69 : vector<2x64xf32>
    %71 = arith.truncf %70 : vector<2x64xf32> to vector<2x64xbf16>
    %c2_35 = arith.constant 2 : index
    %c0_36 = arith.constant 0 : index
    %c0_37 = arith.constant 0 : index
    %72 = vector.load %arg6[%c2_35, %c0_36, %c0_37] : memref<7x64x64xbf16, #tpu.memory_space<vmem>>, vector<1x64x64xbf16>
    %73 = vector.shape_cast %72 : vector<1x64x64xbf16> to vector<64x64xbf16>
    %cst_38 = arith.constant dense<0.000000e+00> : vector<2x64xf32>
    %74 = tpu.matmul %71, %73, %cst_38 {dimension_numbers = #tpu.dot_dimension_numbers<[1], [0], [0], [1], [0, 0, 1, 1], [], []>} : vector<2x64xbf16>, vector<64x64xbf16>, vector<2x64xf32> -> vector<2x64xf32>
    %c3 = arith.constant 3 : index
    %c0_39 = arith.constant 0 : index
    %75 = vector.load %arg7[%c3, %c0_39] : memref<8x64xf32, #tpu.memory_space<vmem>>, vector<1x64xf32>
    %76 = vector.broadcast %75 : vector<1x64xf32> to vector<2x64xf32>
    %77 = arith.addf %74, %76 : vector<2x64xf32>
    %cst_40 = arith.constant 0.000000e+00 : f32
    %78 = vector.broadcast %cst_40 : f32 to vector<2x64xf32>
    %79 = arith.maximumf %77, %78 : vector<2x64xf32>
    %80 = arith.addf %70, %79 : vector<2x64xf32>
    %81 = arith.truncf %80 : vector<2x64xf32> to vector<2x64xbf16>
    %c3_41 = arith.constant 3 : index
    %c0_42 = arith.constant 0 : index
    %c0_43 = arith.constant 0 : index
    %82 = vector.load %arg6[%c3_41, %c0_42, %c0_43] : memref<7x64x64xbf16, #tpu.memory_space<vmem>>, vector<1x64x64xbf16>
    %83 = vector.shape_cast %82 : vector<1x64x64xbf16> to vector<64x64xbf16>
    %cst_44 = arith.constant dense<0.000000e+00> : vector<2x64xf32>
    %84 = tpu.matmul %81, %83, %cst_44 {dimension_numbers = #tpu.dot_dimension_numbers<[1], [0], [0], [1], [0, 0, 1, 1], [], []>} : vector<2x64xbf16>, vector<64x64xbf16>, vector<2x64xf32> -> vector<2x64xf32>
    %c4 = arith.constant 4 : index
    %c0_45 = arith.constant 0 : index
    %85 = vector.load %arg7[%c4, %c0_45] : memref<8x64xf32, #tpu.memory_space<vmem>>, vector<1x64xf32>
    %86 = vector.broadcast %85 : vector<1x64xf32> to vector<2x64xf32>
    %87 = arith.addf %84, %86 : vector<2x64xf32>
    %cst_46 = arith.constant 0.000000e+00 : f32
    %88 = vector.broadcast %cst_46 : f32 to vector<2x64xf32>
    %89 = arith.maximumf %87, %88 : vector<2x64xf32>
    %90 = arith.addf %80, %89 : vector<2x64xf32>
    %91 = arith.truncf %90 : vector<2x64xf32> to vector<2x64xbf16>
    %c4_47 = arith.constant 4 : index
    %c0_48 = arith.constant 0 : index
    %c0_49 = arith.constant 0 : index
    %92 = vector.load %arg6[%c4_47, %c0_48, %c0_49] : memref<7x64x64xbf16, #tpu.memory_space<vmem>>, vector<1x64x64xbf16>
    %93 = vector.shape_cast %92 : vector<1x64x64xbf16> to vector<64x64xbf16>
    %cst_50 = arith.constant dense<0.000000e+00> : vector<2x64xf32>
    %94 = tpu.matmul %91, %93, %cst_50 {dimension_numbers = #tpu.dot_dimension_numbers<[1], [0], [0], [1], [0, 0, 1, 1], [], []>} : vector<2x64xbf16>, vector<64x64xbf16>, vector<2x64xf32> -> vector<2x64xf32>
    %c5 = arith.constant 5 : index
    %c0_51 = arith.constant 0 : index
    %95 = vector.load %arg7[%c5, %c0_51] : memref<8x64xf32, #tpu.memory_space<vmem>>, vector<1x64xf32>
    %96 = vector.broadcast %95 : vector<1x64xf32> to vector<2x64xf32>
    %97 = arith.addf %94, %96 : vector<2x64xf32>
    %cst_52 = arith.constant 0.000000e+00 : f32
    %98 = vector.broadcast %cst_52 : f32 to vector<2x64xf32>
    %99 = arith.maximumf %97, %98 : vector<2x64xf32>
    %100 = arith.addf %90, %99 : vector<2x64xf32>
    %101 = arith.truncf %100 : vector<2x64xf32> to vector<2x64xbf16>
    %c5_53 = arith.constant 5 : index
    %c0_54 = arith.constant 0 : index
    %c0_55 = arith.constant 0 : index
    %102 = vector.load %arg6[%c5_53, %c0_54, %c0_55] : memref<7x64x64xbf16, #tpu.memory_space<vmem>>, vector<1x64x64xbf16>
    %103 = vector.shape_cast %102 : vector<1x64x64xbf16> to vector<64x64xbf16>
    %cst_56 = arith.constant dense<0.000000e+00> : vector<2x64xf32>
    %104 = tpu.matmul %101, %103, %cst_56 {dimension_numbers = #tpu.dot_dimension_numbers<[1], [0], [0], [1], [0, 0, 1, 1], [], []>} : vector<2x64xbf16>, vector<64x64xbf16>, vector<2x64xf32> -> vector<2x64xf32>
    %c6 = arith.constant 6 : index
    %c0_57 = arith.constant 0 : index
    %105 = vector.load %arg7[%c6, %c0_57] : memref<8x64xf32, #tpu.memory_space<vmem>>, vector<1x64xf32>
    %106 = vector.broadcast %105 : vector<1x64xf32> to vector<2x64xf32>
    %107 = arith.addf %104, %106 : vector<2x64xf32>
    %cst_58 = arith.constant 0.000000e+00 : f32
    %108 = vector.broadcast %cst_58 : f32 to vector<2x64xf32>
    %109 = arith.maximumf %107, %108 : vector<2x64xf32>
    %110 = arith.addf %100, %109 : vector<2x64xf32>
    %111 = arith.truncf %110 : vector<2x64xf32> to vector<2x64xbf16>
    %c6_59 = arith.constant 6 : index
    %c0_60 = arith.constant 0 : index
    %c0_61 = arith.constant 0 : index
    %112 = vector.load %arg6[%c6_59, %c0_60, %c0_61] : memref<7x64x64xbf16, #tpu.memory_space<vmem>>, vector<1x64x64xbf16>
    %113 = vector.shape_cast %112 : vector<1x64x64xbf16> to vector<64x64xbf16>
    %cst_62 = arith.constant dense<0.000000e+00> : vector<2x64xf32>
    %114 = tpu.matmul %111, %113, %cst_62 {dimension_numbers = #tpu.dot_dimension_numbers<[1], [0], [0], [1], [0, 0, 1, 1], [], []>} : vector<2x64xbf16>, vector<64x64xbf16>, vector<2x64xf32> -> vector<2x64xf32>
    %c7 = arith.constant 7 : index
    %c0_63 = arith.constant 0 : index
    %115 = vector.load %arg7[%c7, %c0_63] : memref<8x64xf32, #tpu.memory_space<vmem>>, vector<1x64xf32>
    %116 = vector.broadcast %115 : vector<1x64xf32> to vector<2x64xf32>
    %117 = arith.addf %114, %116 : vector<2x64xf32>
    %cst_64 = arith.constant 0.000000e+00 : f32
    %118 = vector.broadcast %cst_64 : f32 to vector<2x64xf32>
    %119 = arith.maximumf %117, %118 : vector<2x64xf32>
    %120 = arith.addf %110, %119 : vector<2x64xf32>
    %c0_65 = arith.constant 0 : index
    %c0_66 = arith.constant 0 : index
    %121 = vector.load %arg8[%c0_65, %c0_66] : memref<2x64xf32, #tpu.memory_space<vmem>>, vector<1x64xf32>
    %122 = vector.broadcast %121 : vector<1x64xf32> to vector<2x64xf32>
    %123 = arith.mulf %120, %122 : vector<2x64xf32>
    %cst_67 = arith.constant dense<0.000000e+00> : vector<2xf32>
    %124 = vector.multi_reduction <add>, %123, %cst_67 [1] : vector<2x64xf32> to vector<2xf32>
    %125 = vector.shape_cast %124 : vector<2xf32> to vector<2x1xf32>
    %c1_68 = arith.constant 1 : index
    %c0_69 = arith.constant 0 : index
    %126 = vector.load %arg8[%c1_68, %c0_69] : memref<2x64xf32, #tpu.memory_space<vmem>>, vector<1x64xf32>
    %127 = vector.broadcast %126 : vector<1x64xf32> to vector<2x64xf32>
    %128 = arith.mulf %120, %127 : vector<2x64xf32>
    %cst_70 = arith.constant dense<0.000000e+00> : vector<2xf32>
    %129 = vector.multi_reduction <add>, %128, %cst_70 [1] : vector<2x64xf32> to vector<2xf32>
    %130 = vector.shape_cast %129 : vector<2xf32> to vector<2x1xf32>
    %131 = tpu.concatenate %125, %130 in 1 : vector<2x1xf32>, vector<2x1xf32> -> vector<2x2xf32>
    %c0_71 = arith.constant 0 : index
    %c0_72 = arith.constant 0 : index
    %132 = vector.load %arg9[%c0_71, %c0_72] : memref<1x2xf32, #tpu.memory_space<vmem>>, vector<1x2xf32>
    %133 = vector.broadcast %132 : vector<1x2xf32> to vector<2x2xf32>
    %134 = arith.addf %131, %133 : vector<2x2xf32>
    %c0_73 = arith.constant 0 : index
    %c0_74 = arith.constant 0 : index
    %135 = vector.load %arg10[%c0_73, %c0_74] : memref<2x2xf32, #tpu.memory_space<vmem>>, vector<2x2xf32>
    tpu.vector_store %arg10[%c0_73, %c0_74], %134 {strides = array<i32>} : memref<2x2xf32, #tpu.memory_space<vmem>>, vector<2x2xf32>,
    return
  }
  func.func @transform_0(%arg0: i32) -> (i32, i32) {
    %c0_i32 = arith.constant 0 : i32
    %c0_i32_0 = arith.constant 0 : i32
    return %arg0, %c0_i32 : i32, i32
  }
  func.func @transform_1(%arg0: i32) -> (i32, i32) {
    %c0_i32 = arith.constant 0 : i32
    %c0_i32_0 = arith.constant 0 : i32
    %c0_i32_1 = arith.constant 0 : i32
    return %c0_i32, %c0_i32_0 : i32, i32
  }
  func.func @transform_2(%arg0: i32) -> (i32, i32) {
    %c0_i32 = arith.constant 0 : i32
    %c0_i32_0 = arith.constant 0 : i32
    %c0_i32_1 = arith.constant 0 : i32
    return %c0_i32, %c0_i32_0 : i32, i32
  }
  func.func @transform_3(%arg0: i32) -> (i32, i32) {
    %c0_i32 = arith.constant 0 : i32
    %c0_i32_0 = arith.constant 0 : i32
    %c0_i32_1 = arith.constant 0 : i32
    return %c0_i32, %c0_i32_0 : i32, i32
  }
  func.func @transform_4(%arg0: i32) -> (i32, i32) {
    %c0_i32 = arith.constant 0 : i32
    %c0_i32_0 = arith.constant 0 : i32
    %c0_i32_1 = arith.constant 0 : i32
    return %c0_i32, %c0_i32_0 : i32, i32
  }
  func.func @transform_5(%arg0: i32) -> (i32, i32, i32) {
    %c0_i32 = arith.constant 0 : i32
    %c0_i32_0 = arith.constant 0 : i32
    %c0_i32_1 = arith.constant 0 : i32
    %c0_i32_2 = arith.constant 0 : i32
    return %c0_i32, %c0_i32_0, %c0_i32_1 : i32, i32, i32
  }
  func.func @transform_6(%arg0: i32) -> (i32, i32) {
    %c0_i32 = arith.constant 0 : i32
    %c0_i32_0 = arith.constant 0 : i32
    %c0_i32_1 = arith.constant 0 : i32
    return %c0_i32, %c0_i32_0 : i32, i32
  }
  func.func @transform_7(%arg0: i32) -> (i32, i32) {
    %c0_i32 = arith.constant 0 : i32
    %c0_i32_0 = arith.constant 0 : i32
    %c0_i32_1 = arith.constant 0 : i32
    return %c0_i32, %c0_i32_0 : i32, i32
  }
  func.func @transform_8(%arg0: i32) -> (i32, i32) {
    %c0_i32 = arith.constant 0 : i32
    %c0_i32_0 = arith.constant 0 : i32
    %c0_i32_1 = arith.constant 0 : i32
    return %c0_i32, %c0_i32_0 : i32, i32
  }
  func.func @transform_9(%arg0: i32) -> (i32, i32) {
    %c0_i32 = arith.constant 0 : i32
    %c0_i32_0 = arith.constant 0 : i32
    return %arg0, %c0_i32 : i32, i32
  }
}

</mosaic_0001>

<llo_original>
// kernel: tpu_custom_call.1
$region0: #{tpu_custom_call.1}
  #allocation0 [shape = 'u32[]', space=smem, size = 0x4, offset = 0x4, fixed_abs, tag = 'smem constant byte address 0x4 - core index']
  #allocation1 [shape = 'u32[72,128]{1,0:T(1,128)}', space=vmem, size = 0x9000, scoped, tag = 'internal scratch']
  %s0 = inlined_call_operand.vmem [shape: bf16[32,12], index: 0, kind: input, shape index: {}]
  %s1 = inlined_call_operand.vmem [shape: bf16[12,32], index: 1, kind: input, shape index: {}]
  %s2 = inlined_call_operand.hbm [shape: f32[3,32], index: 2, kind: input, shape index: {}]
  %s3 = inlined_call_operand.vmem [shape: bf16[32,32], index: 3, kind: input, shape index: {}]
  %s4 = inlined_call_operand.hbm [shape: bf16[32,64], index: 4, kind: input, shape index: {}]
  %s5 = inlined_call_operand.hbm [shape: bf16[7,64,64], index: 5, kind: input, shape index: {}]
  %s6 = inlined_call_operand.hbm [shape: f32[8,64], index: 6, kind: input, shape index: {}]
  %s7 = inlined_call_operand.vmem [shape: f32[2,64], index: 7, kind: input, shape index: {}]
  %s8 = inlined_call_operand.vmem [shape: f32[1,2], index: 8, kind: input, shape index: {}]
  %s9 = inlined_call_operand.hbm [shape: f32[2,2], index: 9, kind: output, shape index: {}]
  %s10 = sld [smem:[#allocation0]]
  $region62: #{tpu_custom_call.1} parent=0
    _
  %s12 = ssub.s32 1, %s10
  %s13 = scalar_select 0, %s12, %s10
  $region1: #{tpu_custom_call.1} parent=0
    #allocation2 [shape = 'u8[2048]{0}', space=vmem, size = 0x800, scoped, tag = 'input window, operand 2, single buffered']
    #allocation3 [shape = 's32[1]{0}', space=sflag, size = 0x4, scoped, tag = 'scoped memory for tpu_custom_call.1']
    #allocation4 [shape = 's32[1]{0}', space=sflag, size = 0x4, scoped, tag = 'scoped memory for tpu_custom_call.1']
    #allocation5 [shape = 'u8[8192]{0}', space=vmem, size = 0x2000, scoped, tag = 'input window, operand 4, single buffered']
    #allocation6 [shape = 's32[1]{0}', space=sflag, size = 0x4, scoped, tag = 'scoped memory for tpu_custom_call.1']
    #allocation7 [shape = 'u8[114688]{0}', space=vmem, size = 0x1c000, scoped, tag = 'input window, operand 5, single buffered']
    #allocation8 [shape = 'u8[4096]{0}', space=vmem, size = 0x1000, scoped, tag = 'input window, operand 6, single buffered']
    #allocation9 [shape = 's32[1]{0}', space=sflag, size = 0x4, scoped, tag = 'scoped memory for tpu_custom_call.1']
    #allocation10 [shape = 'u8[1024]{0}', space=vmem, size = 0x400, scoped, tag = 'output window, operand 0, single buffered']
    %14 = vsyncpa [#allocation3], 0
    %15 = vsyncpa [#allocation6], 0
    %16 = vsyncpa [#allocation9], 0
    %17 = vsyncpa [#allocation4], 0
    // Predicated region
    $region2: #{tpu_custom_call.1} parent=1 // pred_check
      _
    $region3: #{tpu_custom_call.1} parent=1 // pred_check_branch
      %19 = sbr.rel (0) target = $region5
    $region4: #{tpu_custom_call.1} parent=1 // pred_region
      _
    $region5: #{tpu_custom_call.1} parent=1 // pred_fallthru
      _
    // Predicated region
    $region6: #{tpu_custom_call.1} parent=1 // pred_check
      _
    $region7: #{tpu_custom_call.1} parent=1 // pred_check_branch
      %21 = sbr.rel (0) target = $region9
    $region8: #{tpu_custom_call.1} parent=1 // pred_region
      _
    $region9: #{tpu_custom_call.1} parent=1 // pred_fallthru
      _
    // Predicated region
    $region10: #{tpu_custom_call.1} parent=1 // pred_check
      _
    $region11: #{tpu_custom_call.1} parent=1 // pred_check_branch
      %23 = sbr.rel (0) target = $region13
    $region12: #{tpu_custom_call.1} parent=1 // pred_region
      %25 = vsyncadd [#allocation3], 0
      %s27 = sshll.u32 %s2, 4
      %s28 = int_to_ptr.hbm [resolvable:$true] %s27
      %s29 = sshll.u32 [#allocation2], 4
      %s30 = int_to_ptr.vmem [resolvable:$true] %s29
      %32 = dma.hbm_to_vmem [thread:$0]  %s28, 64, %s30, [#allocation3]
    $region13: #{tpu_custom_call.1} parent=1 // pred_fallthru
      _
    // Predicated region
    $region14: #{tpu_custom_call.1} parent=1 // pred_check
      _
    $region15: #{tpu_custom_call.1} parent=1 // pred_check_branch
      %34 = sbr.rel (0) target = $region17
    $region16: #{tpu_custom_call.1} parent=1 // pred_region
      _
    $region17: #{tpu_custom_call.1} parent=1 // pred_fallthru
      _
    // Predicated region
    $region18: #{tpu_custom_call.1} parent=1 // pred_check
      _
    $region19: #{tpu_custom_call.1} parent=1 // pred_check_branch
      %36 = sbr.rel (0) target = $region21
    $region20: #{tpu_custom_call.1} parent=1 // pred_region
      %38 = vsyncadd [#allocation6], 0
      %s39 = sshll.u32 %s4, 4
      %s40 = int_to_ptr.hbm [resolvable:$true] %s39
      %s41 = sshll.u32 [#allocation5], 4
      %s42 = int_to_ptr.vmem [resolvable:$true] %s41
      %47 = dma.hbm_to_vmem [thread:$0]  %s40, 256, %s42, [#allocation6], 64, 64, 4
    $region21: #{tpu_custom_call.1} parent=1 // pred_fallthru
      _
    // Predicated region
    $region22: #{tpu_custom_call.1} parent=1 // pred_check
      _
    $region23: #{tpu_custom_call.1} parent=1 // pred_check_branch
      %49 = sbr.rel (0) target = $region25
    $region24: #{tpu_custom_call.1} parent=1 // pred_region
      %51 = vsyncadd [#allocation6], 0
      %s52 = sshll.u32 %s5, 4
      %s53 = int_to_ptr.hbm [resolvable:$true] %s52
      %s54 = sshll.u32 [#allocation7], 4
      %s55 = int_to_ptr.vmem [resolvable:$true] %s54
      %60 = dma.hbm_to_vmem [thread:$0]  %s53, 3584, %s55, [#allocation6], 64, 64, 4
    $region25: #{tpu_custom_call.1} parent=1 // pred_fallthru
      _
    // Predicated region
    $region26: #{tpu_custom_call.1} parent=1 // pred_check
      _
    $region27: #{tpu_custom_call.1} parent=1 // pred_check_branch
      %62 = sbr.rel (0) target = $region29
    $region28: #{tpu_custom_call.1} parent=1 // pred_region
      %64 = vsyncadd [#allocation9], 0
      %s66 = sshll.u32 %s6, 4
      %s67 = int_to_ptr.hbm [resolvable:$true] %s66
      %s68 = sshll.u32 [#allocation8], 4
      %s69 = int_to_ptr.vmem [resolvable:$true] %s68
      %71 = dma.hbm_to_vmem [thread:$0]  %s67, 128, %s69, [#allocation9]
    $region29: #{tpu_custom_call.1} parent=1 // pred_fallthru
      _
    // Predicated region
    $region30: #{tpu_custom_call.1} parent=1 // pred_check
      _
    $region31: #{tpu_custom_call.1} parent=1 // pred_check_branch
      %73 = sbr.rel (0) target = $region33
    $region32: #{tpu_custom_call.1} parent=1 // pred_region
      _
    $region33: #{tpu_custom_call.1} parent=1 // pred_fallthru
      _
    // Predicated region
    $region34: #{tpu_custom_call.1} parent=1 // pred_check
      _
    $region35: #{tpu_custom_call.1} parent=1 // pred_check_branch
      %75 = sbr.rel (0) target = $region37
    $region36: #{tpu_custom_call.1} parent=1 // pred_region
      _
    $region37: #{tpu_custom_call.1} parent=1 // pred_fallthru
      _
    // Predicated region
    $region38: #{tpu_custom_call.1} parent=1 // pred_check
      _
    $region39: #{tpu_custom_call.1} parent=1 // pred_check_branch
      %77 = sbr.rel (0) target = $region41
    $region40: #{tpu_custom_call.1} parent=1 // pred_region
      %79 = dma.done [#allocation3], 64
    $region41: #{tpu_custom_call.1} parent=1 // pred_fallthru
      _
    // Predicated region
    $region42: #{tpu_custom_call.1} parent=1 // pred_check
      _
    $region43: #{tpu_custom_call.1} parent=1 // pred_check_branch
      %81 = sbr.rel (0) target = $region45
    $region44: #{tpu_custom_call.1} parent=1 // pred_region
      %83 = dma.done [#allocation6], 256
    $region45: #{tpu_custom_call.1} parent=1 // pred_fallthru
      _
    // Predicated region
    $region46: #{tpu_custom_call.1} parent=1 // pred_check
      _
    $region47: #{tpu_custom_call.1} parent=1 // pred_check_branch
      %85 = sbr.rel (0) target = $region49
    $region48: #{tpu_custom_call.1} parent=1 // pred_region
      %87 = dma.done [#allocation6], 3584
    $region49: #{tpu_custom_call.1} parent=1 // pred_fallthru
      _
    // Predicated region
    $region50: #{tpu_custom_call.1} parent=1 // pred_check
      _
    $region51: #{tpu_custom_call.1} parent=1 // pred_check_branch
      %89 = sbr.rel (0) target = $region53
    $region52: #{tpu_custom_call.1} parent=1 // pred_region
      %91 = dma.done [#allocation9], 128
    $region53: #{tpu_custom_call.1} parent=1 // pred_fallthru
      _
    %v93 = vld [vmem:[#allocation2] sm:$0x1]
    %v94 = vld [vmem:[#allocation2 + $0x1] sm:$0x1]
    %v95 = vld [vmem:[#allocation2 + $0x2] sm:$0x1]
    %v96 = vld [vmem:[%s0] sm:$0xf]
    %v97 = vld [vmem:[%s0 + $0x4] sm:$0xf]
    %v98 = vld [vmem:[%s0 + $0x8] sm:$0xf]
    %v99 = vld [vmem:[%s0 + $0xc] sm:$0xf]
    %v100 = vld [vmem:[%s1] sm:$0xf]
    %v101 = vld [vmem:[%s1 + $0x4] sm:$0x3]
    %v102 = vperm.slane %v93, 0
    %v107 = vunpack.c.l.b16 %v96
    %v108 = vunpack.c.l.b16 %v97
    %v109 = vunpack.c.l.b16 %v98
    %v110 = vunpack.c.l.b16 %v99
    %v111 = vpack.c.b16 %v108, %v107
    %v112 = vpack.c.b16 %v110, %v109
    %v115 = vunpack.c.l.b16 %v100
    %v116 = vunpack.c.l.b16 %v101
    %v117 = vpack.c.b16 %v116, %v115
    %vm118 = vcmask 97280
    %v120 = vsel %vm118, %v111, 0
    %v123 = vsel %vm118, %v112, 0
    %vm125 = vcmask 1045504
    %v127 = vsel %vm125, %v117, 0
    %129 = vmatpush.bf16.msra.mxu0 0
    %130 = vmatpush.bf16.msra.mxu0 0
    %131 = vmatpush.bf16.msra.mxu0 0
    %132 = vmatpush.bf16.msra.mxu0 0
    %133 = vmatpush.bf16.msra.mxu0 0
    %134 = vmatpush.bf16.msra.mxu0 0
    %135 = vmatpush.bf16.msra.mxu0 0
    %136 = vmatpush.bf16.msra.mxu0 %v127
    %137 = vmatmul.bf16.gmra.mxu0 %v120
    %v138 = vpop.f32.mrf.mxu0
    %v139 = vadd.f32 %v102, %v138
    %v140 = vpop.f32.mrf.mxu0
    %v141 = vadd.f32 %v102, %v140
    %142 = vmatmul.bf16.gmra.mxu0 %v123
    %v143 = vpop.f32.mrf.mxu0
    %v144 = vadd.f32 %v102, %v143
    %v145 = vpop.f32.mrf.mxu0
    %v146 = vadd.f32 %v102, %v145
    %147 = vdwg.mxu0
    %v148 = vtanh.pop %v139
    %v149 = vtanh.pop %v141
    %v150 = vtanh.pop %v144
    %v151 = vtanh.pop %v146
    %v152 = vpack.c.bf16 %v149, %v148
    %v153 = vpack.c.bf16 %v151, %v150
    %v154 = vld [vmem:[%s3] sm:$0xf]
    %v155 = vld [vmem:[%s3 + $0x4] sm:$0xf]
    %v156 = vld [vmem:[%s3 + $0x8] sm:$0xf]
    %v157 = vld [vmem:[%s3 + $0xc] sm:$0xf]
    %v158 = vperm.slane %v94, 0
    %v163 = vunpack.c.l.b16 %v154
    %v164 = vunpack.c.l.b16 %v155
    %v165 = vunpack.c.l.b16 %v156
    %v166 = vunpack.c.l.b16 %v157
    %v167 = vpack.c.b16 %v164, %v163
    %v168 = vpack.c.b16 %v166, %v165
    %vm171 = vcmask 261120
    %v173 = vsel %vm171, %v152, 0
    %v176 = vsel %vm171, %v153, 0
    %178 = vmatpush.bf16.msra.mxu0 0
    %179 = vmatpush.bf16.msra.mxu0 0
    %180 = vmatpush.bf16.msra.mxu0 0
    %181 = vmatpush.bf16.msra.mxu0 0
    %182 = vmatpush.bf16.msra.mxu0 0
    %183 = vmatpush.bf16.msra.mxu0 0
    %184 = vmatpush.bf16.msra.mxu0 %v168
    %185 = vmatpush.bf16.msra.mxu0 %v167
    %186 = vmatmul.bf16.gmra.mxu0 %v173
    %v187 = vpop.f32.mrf.mxu0
    %v188 = vadd.f32 %v158, %v187
    %v189 = vpop.f32.mrf.mxu0
    %v190 = vadd.f32 %v158, %v189
    %191 = vmatmul.bf16.gmra.mxu0 %v176
    %v192 = vpop.f32.mrf.mxu0
    %v193 = vadd.f32 %v158, %v192
    %v194 = vpop.f32.mrf.mxu0
    %v195 = vadd.f32 %v158, %v194
    %196 = vdwg.mxu0
    %v197 = vtanh.pop %v188
    %v198 = vtanh.pop %v190
    %v199 = vtanh.pop %v193
    %v200 = vtanh.pop %v195
    %v201 = vperm.slane %v95, 0
    %v202 = vmul.f32 %v197, %v201
    %v203 = vmul.f32 %v198, %v201
    %v204 = vmul.f32 %v199, %v201
    %v205 = vmul.f32 %v200, %v201
    %v206 = vsel %vm171, %v202, 0.0
    %207 = vadd.xlane.f32.xlu0 %v206
    %v208 = vpop.xlane.xlu0 %207
    %v209 = vsel %vm171, %v203, 0.0
    %210 = vadd.xlane.f32.xlu0 %v209
    %v211 = vpop.xlane.xlu0 %210
    %v212 = vsel %vm171, %v204, 0.0
    %213 = vadd.xlane.f32.xlu0 %v212
    %v214 = vpop.xlane.xlu0 %213
    %v215 = vsel %vm171, %v205, 0.0
    %216 = vadd.xlane.f32.xlu0 %v215
    %v217 = vpop.xlane.xlu0 %216
    %v218 = vlaneseq
    %v219 = vshrl.u32 %v218, 7
    %v220 = vadd.s32 %v219, 8
    %vm221 = vcmp.lt.s32.totalorder %v219, 14
    %vm222 = vcmp.lt.s32.totalorder %v220, 14
    %v223 = vsel %vm221, 1, 0
    %v224 = vsel %vm222, 1, 0
    %vm225 = vcmp.eq.s32.totalorder %v223, 1
    %vm226 = vcmp.eq.s32.totalorder %v224, 1
    %v227 = vsel %vm225, %v208, -1e+30
    %v228 = vsel %vm226, %v211, -1e+30
    %v229 = vsel %vm225, %v214, -1e+30
    %v230 = vsel %vm226, %v217, -1e+30
    %v231 = vmax.f32 %v227, %v228
    %v232 = vrot.slane %v231, 4
    %v233 = vmax.f32 %v231, %v232
    %v234 = vrot.slane %v233, 2
    %v235 = vmax.f32 %v233, %v234
    %v236 = vrot.slane %v235, 1
    %v237 = vmax.f32 %v235, %v236
    %v238 = vmax.f32 %v229, %v230
    %v239 = vrot.slane %v238, 4
    %v240 = vmax.f32 %v238, %v239
    %v241 = vrot.slane %v240, 2
    %v242 = vmax.f32 %v240, %v241
    %v243 = vrot.slane %v242, 1
    %v244 = vmax.f32 %v242, %v243
    %v245 = vsub.f32 %v227, %v237
    %v246 = vsub.f32 %v228, %v237
    %v247 = vsub.f32 %v229, %v244
    %v248 = vsub.f32 %v230, %v244
    %v249 = vmul.f32 %v245, 1.442695
    %v250 = vpow.pop %v249
    %v251 = vmul.f32 %v246, 1.442695
    %v252 = vpow.pop %v251
    %v253 = vmul.f32 %v247, 1.442695
    %v254 = vpow.pop %v253
    %v255 = vmul.f32 %v248, 1.442695
    %v256 = vpow.pop %v255
    %v257 = vadd.f32 %v250, %v252
    %v258 = vrot.slane %v257, 4
    %v259 = vadd.f32 %v257, %v258
    %v260 = vrot.slane %v259, 2
    %v261 = vadd.f32 %v259, %v260
    %v262 = vrot.slane %v261, 1
    %v263 = vadd.f32 %v261, %v262
    %v264 = vadd.f32 %v254, %v256
    %v265 = vrot.slane %v264, 4
    %v266 = vadd.f32 %v264, %v265
    %v267 = vrot.slane %v266, 2
    %v268 = vadd.f32 %v266, %v267
    %v269 = vrot.slane %v268, 1
    %v270 = vadd.f32 %v268, %v269
    %v271 = vrcp.pop %v263
    %v272 = vrcp.pop %v270
    %v273 = vmul.f32 %v250, %v271
    %v274 = vmul.f32 %v252, %v271
    %v275 = vmul.f32 %v254, %v272
    %v276 = vmul.f32 %v256, %v272
    %v277 = vmul.f32 %v273, %v148
    %v278 = vmul.f32 %v274, %v149
    %v279 = vmul.f32 %v275, %v150
    %v280 = vmul.f32 %v276, %v151
    %v281 = vsel %vm171, %v277, 0.0
    %v282 = vsel %vm171, %v278, 0.0
    %v283 = vadd.f32 %v281, %v282
    %v284 = vrot.slane %v283, 4
    %v285 = vadd.f32 %v283, %v284
    %v286 = vrot.slane %v285, 2
    %v287 = vadd.f32 %v285, %v286
    %v288 = vrot.slane %v287, 1
    %v289 = vadd.f32 %v287, %v288
    %v290 = vsel %vm171, %v279, 0.0
    %v291 = vsel %vm171, %v280, 0.0
    %v292 = vadd.f32 %v290, %v291
    %v293 = vrot.slane %v292, 4
    %v294 = vadd.f32 %v292, %v293
    %v295 = vrot.slane %v294, 2
    %v296 = vadd.f32 %v294, %v295
    %v297 = vrot.slane %v296, 1
    %v298 = vadd.f32 %v296, %v297
    %v299 = vld [vmem:[#allocation8] sm:$0x1]
    %v300 = vpack.c.bf16 %v289, %v289
    %v301 = vpack.c.bf16 %v298, %v298
    %v302 = vld [vmem:[#allocation5] sm:$0xf]
    %v303 = vld [vmem:[#allocation5 + $0x4] sm:$0xf]
    %v304 = vld [vmem:[#allocation5 + $0x8] sm:$0xf]
    %v305 = vld [vmem:[#allocation5 + $0xc] sm:$0xf]
    %v306 = vperm.slane %v299, 0
    %v309 = vunpack.c.l.b16 %v300
    %v310 = vunpack.c.l.b16 %v301
    %vm311 = vcmask 1041409
    %v312 = vsel %vm311, %v310, %v309
    %v313 = vpack.c.b16 %v312, %v312
    %v318 = vunpack.c.l.b16 %v302
    %v319 = vunpack.c.l.b16 %v303
    %v320 = vunpack.c.l.b16 %v304
    %v321 = vunpack.c.l.b16 %v305
    %v322 = vpack.c.b16 %v319, %v318
    %v323 = vpack.c.b16 %v321, %v320
    %v327 = vsel %vm171, %v313, 0
    %329 = vmatpush.bf16.msra.mxu0 0
    %330 = vmatpush.bf16.msra.mxu0 0
    %331 = vmatpush.bf16.msra.mxu0 0
    %332 = vmatpush.bf16.msra.mxu0 0
    %333 = vmatpush.bf16.msra.mxu0 0
    %334 = vmatpush.bf16.msra.mxu0 0
    %335 = vmatpush.bf16.msra.mxu0 %v323
    %336 = vmatpush.bf16.msra.mxu0 %v322
    %337 = vmatmul.bf16.gmra.mxu0 %v327
    %v338 = vpop.f32.mrf.mxu0
    %v339 = vadd.f32 %v306, %v338
    %v340 = vpop.f32.mrf.mxu0
    %341 = vdwg.mxu0
    %v342 = vmax.f32 %v339, 0.0
    %v343 = vpack.c.bf16 %v342, %v342
    %v344 = vld [vmem:[#allocation7] sm:$0xf]
    %v345 = vld [vmem:[#allocation7 + $0x4] sm:$0xf]
    %v346 = vld [vmem:[#allocation7 + $0x8] sm:$0xf]
    %v347 = vld [vmem:[#allocation7 + $0xc] sm:$0xf]
    %v348 = vld [vmem:[#allocation7 + $0x10] sm:$0xf]
    %v349 = vld [vmem:[#allocation7 + $0x14] sm:$0xf]
    %v350 = vld [vmem:[#allocation7 + $0x18] sm:$0xf]
    %v351 = vld [vmem:[#allocation7 + $0x1c] sm:$0xf]
    %v352 = vld [vmem:[#allocation8 + $0x1] sm:$0x1]
    %v353 = vperm.slane %v352, 0
    %v362 = vunpack.c.l.b16 %v344
    %v363 = vunpack.c.l.b16 %v345
    %v364 = vunpack.c.l.b16 %v346
    %v365 = vunpack.c.l.b16 %v347
    %v366 = vunpack.c.l.b16 %v348
    %v367 = vunpack.c.l.b16 %v349
    %v368 = vunpack.c.l.b16 %v350
    %v369 = vunpack.c.l.b16 %v351
    %v370 = vpack.c.b16 %v363, %v362
    %v371 = vpack.c.b16 %v365, %v364
    %v372 = vpack.c.b16 %v367, %v366
    %v373 = vpack.c.b16 %v369, %v368
    %vm378 = vcmask 523264
    %v380 = vsel %vm378, %v343, 0
    %382 = vmatpush.bf16.msra.mxu0 0
    %383 = vmatpush.bf16.msra.mxu0 0
    %384 = vmatpush.bf16.msra.mxu0 0
    %385 = vmatpush.bf16.msra.mxu0 0
    %386 = vmatpush.bf16.msra.mxu0 %v373
    %387 = vmatpush.bf16.msra.mxu0 %v372
    %388 = vmatpush.bf16.msra.mxu0 %v371
    %389 = vmatpush.bf16.msra.mxu0 %v370
    %390 = vmatmul.bf16.gmra.mxu0 %v380
    %v391 = vpop.f32.mrf.mxu0
    %v392 = vadd.f32 %v353, %v391
    %v393 = vpop.f32.mrf.mxu0
    %394 = vdwg.mxu0
    %v395 = vmax.f32 %v392, 0.0
    %v396 = vadd.f32 %v342, %v395
    %v397 = vpack.c.bf16 %v396, %v396
    %s398 = scalar_lea.vmem [#allocation7], 32
    %v399 = vld [vmem:[%s398] sm:$0xf]
    %v400 = vld [vmem:[%s398 + $0x4] sm:$0xf]
    %v401 = vld [vmem:[%s398 + $0x8] sm:$0xf]
    %v402 = vld [vmem:[%s398 + $0xc] sm:$0xf]
    %v403 = vld [vmem:[%s398 + $0x10] sm:$0xf]
    %v404 = vld [vmem:[%s398 + $0x14] sm:$0xf]
    %v405 = vld [vmem:[%s398 + $0x18] sm:$0xf]
    %v406 = vld [vmem:[%s398 + $0x1c] sm:$0xf]
    %v407 = vld [vmem:[#allocation8 + $0x2] sm:$0x1]
    %v408 = vperm.slane %v407, 0
    %v417 = vunpack.c.l.b16 %v399
    %v418 = vunpack.c.l.b16 %v400
    %v419 = vunpack.c.l.b16 %v401
    %v420 = vunpack.c.l.b16 %v402
    %v421 = vunpack.c.l.b16 %v403
    %v422 = vunpack.c.l.b16 %v404
    %v423 = vunpack.c.l.b16 %v405
    %v424 = vunpack.c.l.b16 %v406
    %v425 = vpack.c.b16 %v418, %v417
    %v426 = vpack.c.b16 %v420, %v419
    %v427 = vpack.c.b16 %v422, %v421
    %v428 = vpack.c.b16 %v424, %v423
    %v434 = vsel %vm378, %v397, 0
    %436 = vmatpush.bf16.msra.mxu0 0
    %437 = vmatpush.bf16.msra.mxu0 0
    %438 = vmatpush.bf16.msra.mxu0 0
    %439 = vmatpush.bf16.msra.mxu0 0
    %440 = vmatpush.bf16.msra.mxu0 %v428
    %441 = vmatpush.bf16.msra.mxu0 %v427
    %442 = vmatpush.bf16.msra.mxu0 %v426
    %443 = vmatpush.bf16.msra.mxu0 %v425
    %444 = vmatmul.bf16.gmra.mxu0 %v434
    %v445 = vpop.f32.mrf.mxu0
    %v446 = vadd.f32 %v408, %v445
    %v447 = vpop.f32.mrf.mxu0
    %448 = vdwg.mxu0
    %v449 = vmax.f32 %v446, 0.0
    %v450 = vadd.f32 %v396, %v449
    %v451 = vpack.c.bf16 %v450, %v450
    %s452 = scalar_lea.vmem [#allocation7], 64
    %v453 = vld [vmem:[%s452] sm:$0xf]
    %v454 = vld [vmem:[%s452 + $0x4] sm:$0xf]
    %v455 = vld [vmem:[%s452 + $0x8] sm:$0xf]
    %v456 = vld [vmem:[%s452 + $0xc] sm:$0xf]
    %v457 = vld [vmem:[%s452 + $0x10] sm:$0xf]
    %v458 = vld [vmem:[%s452 + $0x14] sm:$0xf]
    %v459 = vld [vmem:[%s452 + $0x18] sm:$0xf]
    %v460 = vld [vmem:[%s452 + $0x1c] sm:$0xf]
    %v461 = vld [vmem:[#allocation8 + $0x3] sm:$0x1]
    %v462 = vperm.slane %v461, 0
    %v471 = vunpack.c.l.b16 %v453
    %v472 = vunpack.c.l.b16 %v454
    %v473 = vunpack.c.l.b16 %v455
    %v474 = vunpack.c.l.b16 %v456
    %v475 = vunpack.c.l.b16 %v457
    %v476 = vunpack.c.l.b16 %v458
    %v477 = vunpack.c.l.b16 %v459
    %v478 = vunpack.c.l.b16 %v460
    %v479 = vpack.c.b16 %v472, %v471
    %v480 = vpack.c.b16 %v474, %v473
    %v481 = vpack.c.b16 %v476, %v475
    %v482 = vpack.c.b16 %v478, %v477
    %v488 = vsel %vm378, %v451, 0
    %490 = vmatpush.bf16.msra.mxu0 0
    %491 = vmatpush.bf16.msra.mxu0 0
    %492 = vmatpush.bf16.msra.mxu0 0
    %493 = vmatpush.bf16.msra.mxu0 0
    %494 = vmatpush.bf16.msra.mxu0 %v482
    %495 = vmatpush.bf16.msra.mxu0 %v481
    %496 = vmatpush.bf16.msra.mxu0 %v480
    %497 = vmatpush.bf16.msra.mxu0 %v479
    %498 = vmatmul.bf16.gmra.mxu0 %v488
    %v499 = vpop.f32.mrf.mxu0
    %v500 = vadd.f32 %v462, %v499
    %v501 = vpop.f32.mrf.mxu0
    %502 = vdwg.mxu0
    %v503 = vmax.f32 %v500, 0.0
    %v504 = vadd.f32 %v450, %v503
    %v505 = vpack.c.bf16 %v504, %v504
    %s506 = scalar_lea.vmem [#allocation7], 96
    %v507 = vld [vmem:[%s506] sm:$0xf]
    %v508 = vld [vmem:[%s506 + $0x4] sm:$0xf]
    %v509 = vld [vmem:[%s506 + $0x8] sm:$0xf]
    %v510 = vld [vmem:[%s506 + $0xc] sm:$0xf]
    %v511 = vld [vmem:[%s506 + $0x10] sm:$0xf]
    %v512 = vld [vmem:[%s506 + $0x14] sm:$0xf]
    %v513 = vld [vmem:[%s506 + $0x18] sm:$0xf]
    %v514 = vld [vmem:[%s506 + $0x1c] sm:$0xf]
    %v515 = vld [vmem:[#allocation8 + $0x4] sm:$0x1]
    %v516 = vperm.slane %v515, 0
    %v525 = vunpack.c.l.b16 %v507
    %v526 = vunpack.c.l.b16 %v508
    %v527 = vunpack.c.l.b16 %v509
    %v528 = vunpack.c.l.b16 %v510
    %v529 = vunpack.c.l.b16 %v511
    %v530 = vunpack.c.l.b16 %v512
    %v531 = vunpack.c.l.b16 %v513
    %v532 = vunpack.c.l.b16 %v514
    %v533 = vpack.c.b16 %v526, %v525
    %v534 = vpack.c.b16 %v528, %v527
    %v535 = vpack.c.b16 %v530, %v529
    %v536 = vpack.c.b16 %v532, %v531
    %v542 = vsel %vm378, %v505, 0
    %544 = vmatpush.bf16.msra.mxu0 0
    %545 = vmatpush.bf16.msra.mxu0 0
    %546 = vmatpush.bf16.msra.mxu0 0
    %547 = vmatpush.bf16.msra.mxu0 0
    %548 = vmatpush.bf16.msra.mxu0 %v536
    %549 = vmatpush.bf16.msra.mxu0 %v535
    %550 = vmatpush.bf16.msra.mxu0 %v534
    %551 = vmatpush.bf16.msra.mxu0 %v533
    %552 = vmatmul.bf16.gmra.mxu0 %v542
    %v553 = vpop.f32.mrf.mxu0
    %v554 = vadd.f32 %v516, %v553
    %v555 = vpop.f32.mrf.mxu0
    %556 = vdwg.mxu0
    %v557 = vmax.f32 %v554, 0.0
    %v558 = vadd.f32 %v504, %v557
    %v559 = vpack.c.bf16 %v558, %v558
    %s560 = scalar_lea.vmem [#allocation7], 128
    %v561 = vld [vmem:[%s560] sm:$0xf]
    %v562 = vld [vmem:[%s560 + $0x4] sm:$0xf]
    %v563 = vld [vmem:[%s560 + $0x8] sm:$0xf]
    %v564 = vld [vmem:[%s560 + $0xc] sm:$0xf]
    %v565 = vld [vmem:[%s560 + $0x10] sm:$0xf]
    %v566 = vld [vmem:[%s560 + $0x14] sm:$0xf]
    %v567 = vld [vmem:[%s560 + $0x18] sm:$0xf]
    %v568 = vld [vmem:[%s560 + $0x1c] sm:$0xf]
    %v569 = vld [vmem:[#allocation8 + $0x5] sm:$0x1]
    %v570 = vperm.slane %v569, 0
    %v579 = vunpack.c.l.b16 %v561
    %v580 = vunpack.c.l.b16 %v562
    %v581 = vunpack.c.l.b16 %v563
    %v582 = vunpack.c.l.b16 %v564
    %v583 = vunpack.c.l.b16 %v565
    %v584 = vunpack.c.l.b16 %v566
    %v585 = vunpack.c.l.b16 %v567
    %v586 = vunpack.c.l.b16 %v568
    %v587 = vpack.c.b16 %v580, %v579
    %v588 = vpack.c.b16 %v582, %v581
    %v589 = vpack.c.b16 %v584, %v583
    %v590 = vpack.c.b16 %v586, %v585
    %v596 = vsel %vm378, %v559, 0
    %598 = vmatpush.bf16.msra.mxu0 0
    %599 = vmatpush.bf16.msra.mxu0 0
    %600 = vmatpush.bf16.msra.mxu0 0
    %601 = vmatpush.bf16.msra.mxu0 0
    %602 = vmatpush.bf16.msra.mxu0 %v590
    %603 = vmatpush.bf16.msra.mxu0 %v589
    %604 = vmatpush.bf16.msra.mxu0 %v588
    %605 = vmatpush.bf16.msra.mxu0 %v587
    %606 = vmatmul.bf16.gmra.mxu0 %v596
    %v607 = vpop.f32.mrf.mxu0
    %v608 = vadd.f32 %v570, %v607
    %v609 = vpop.f32.mrf.mxu0
    %610 = vdwg.mxu0
    %v611 = vmax.f32 %v608, 0.0
    %v612 = vadd.f32 %v558, %v611
    %v613 = vpack.c.bf16 %v612, %v612
    %s614 = scalar_lea.vmem [#allocation7], 160
    %v615 = vld [vmem:[%s614] sm:$0xf]
    %v616 = vld [vmem:[%s614 + $0x4] sm:$0xf]
    %v617 = vld [vmem:[%s614 + $0x8] sm:$0xf]
    %v618 = vld [vmem:[%s614 + $0xc] sm:$0xf]
    %v619 = vld [vmem:[%s614 + $0x10] sm:$0xf]
    %v620 = vld [vmem:[%s614 + $0x14] sm:$0xf]
    %v621 = vld [vmem:[%s614 + $0x18] sm:$0xf]
    %v622 = vld [vmem:[%s614 + $0x1c] sm:$0xf]
    %v623 = vld [vmem:[#allocation8 + $0x6] sm:$0x1]
    %v624 = vperm.slane %v623, 0
    %v633 = vunpack.c.l.b16 %v615
    %v634 = vunpack.c.l.b16 %v616
    %v635 = vunpack.c.l.b16 %v617
    %v636 = vunpack.c.l.b16 %v618
    %v637 = vunpack.c.l.b16 %v619
    %v638 = vunpack.c.l.b16 %v620
    %v639 = vunpack.c.l.b16 %v621
    %v640 = vunpack.c.l.b16 %v622
    %v641 = vpack.c.b16 %v634, %v633
    %v642 = vpack.c.b16 %v636, %v635
    %v643 = vpack.c.b16 %v638, %v637
    %v644 = vpack.c.b16 %v640, %v639
    %v650 = vsel %vm378, %v613, 0
    %652 = vmatpush.bf16.msra.mxu0 0
    %653 = vmatpush.bf16.msra.mxu0 0
    %654 = vmatpush.bf16.msra.mxu0 0
    %655 = vmatpush.bf16.msra.mxu0 0
    %656 = vmatpush.bf16.msra.mxu0 %v644
    %657 = vmatpush.bf16.msra.mxu0 %v643
    %658 = vmatpush.bf16.msra.mxu0 %v642
    %659 = vmatpush.bf16.msra.mxu0 %v641
    %660 = vmatmul.bf16.gmra.mxu0 %v650
    %v661 = vpop.f32.mrf.mxu0
    %v662 = vadd.f32 %v624, %v661
    %v663 = vpop.f32.mrf.mxu0
    %664 = vdwg.mxu0
    %v665 = vmax.f32 %v662, 0.0
    %v666 = vadd.f32 %v612, %v665
    %v667 = vpack.c.bf16 %v666, %v666
    %s668 = scalar_lea.vmem [#allocation7], 192
    %v669 = vld [vmem:[%s668] sm:$0xf]
    %v670 = vld [vmem:[%s668 + $0x4] sm:$0xf]
    %v671 = vld [vmem:[%s668 + $0x8] sm:$0xf]
    %v672 = vld [vmem:[%s668 + $0xc] sm:$0xf]
    %v673 = vld [vmem:[%s668 + $0x10] sm:$0xf]
    %v674 = vld [vmem:[%s668 + $0x14] sm:$0xf]
    %v675 = vld [vmem:[%s668 + $0x18] sm:$0xf]
    %v676 = vld [vmem:[%s668 + $0x1c] sm:$0xf]
    %v677 = vld [vmem:[#allocation8 + $0x7] sm:$0x1]
    %v678 = vperm.slane %v677, 0
    %v687 = vunpack.c.l.b16 %v669
    %v688 = vunpack.c.l.b16 %v670
    %v689 = vunpack.c.l.b16 %v671
    %v690 = vunpack.c.l.b16 %v672
    %v691 = vunpack.c.l.b16 %v673
    %v692 = vunpack.c.l.b16 %v674
    %v693 = vunpack.c.l.b16 %v675
    %v694 = vunpack.c.l.b16 %v676
    %v695 = vpack.c.b16 %v688, %v687
    %v696 = vpack.c.b16 %v690, %v689
    %v697 = vpack.c.b16 %v692, %v691
    %v698 = vpack.c.b16 %v694, %v693
    %v704 = vsel %vm378, %v667, 0
    %706 = vmatpush.bf16.msra.mxu0 0
    %707 = vmatpush.bf16.msra.mxu0 0
    %708 = vmatpush.bf16.msra.mxu0 0
    %709 = vmatpush.bf16.msra.mxu0 0
    %710 = vmatpush.bf16.msra.mxu0 %v698
    %711 = vmatpush.bf16.msra.mxu0 %v697
    %712 = vmatpush.bf16.msra.mxu0 %v696
    %713 = vmatpush.bf16.msra.mxu0 %v695
    %714 = vmatmul.bf16.gmra.mxu0 %v704
    %v715 = vpop.f32.mrf.mxu0
    %v716 = vadd.f32 %v678, %v715
    %v717 = vpop.f32.mrf.mxu0
    %718 = vdwg.mxu0
    %v719 = vmax.f32 %v716, 0.0
    %v720 = vadd.f32 %v666, %v719
    %v721 = vld [vmem:[%s7] sm:$0x1]
    %v722 = vperm.slane %v721, 0
    %v723 = vmul.f32 %v720, %v722
    %vm724 = vcmask 517120
    %v725 = vsel %vm724, %v723, 0.0
    %726 = vadd.xlane.f32.xlu0 %v725
    %v727 = vpop.xlane.xlu0 %726
    %v728 = vld [vmem:[%s7 + $0x1] sm:$0x1]
    %v729 = vperm.slane %v728, 0
    %v730 = vmul.f32 %v720, %v729
    %v731 = vsel %vm724, %v730, 0.0
    %732 = vadd.xlane.f32.xlu0 %v731
    %v733 = vpop.xlane.xlu0 %732
    %vm734 = vcmask 7168
    %v735 = vsel %vm734, %v727, %v733
    %v736 = vld [vmem:[%s8] sm:$0x1]
    %v738 = vperm.slane %v736, 0
    %v740 = vadd.f32 %v735, %v738
    %vm741 = vcmask 9216
    %742 = vst.msk [vmem:[#allocation10] sm:$0x3] %vm741, %v740
    // Predicated region
    $region54: #{tpu_custom_call.1} parent=1 // pred_check
      _
    $region55: #{tpu_custom_call.1} parent=1 // pred_check_branch
      %744 = sbr.rel (0) target = $region57
    $region56: #{tpu_custom_call.1} parent=1 // pred_region
      %746 = vsyncadd [#allocation4], 0
      %s748 = sshll.u32 [#allocation10], 4
      %s749 = int_to_ptr.vmem [resolvable:$true] %s748
      %s750 = sshll.u32 %s9, 4
      %s751 = int_to_ptr.hbm [resolvable:$true] %s750
      %753 = dma.vmem_to_hbm [thread:$0]  %s749, 32, %s751, [#allocation4]
    $region57: #{tpu_custom_call.1} parent=1 // pred_fallthru
      _
    // Predicated region
    $region58: #{tpu_custom_call.1} parent=1 // pred_check
      _
    $region59: #{tpu_custom_call.1} parent=1 // pred_check_branch
      %755 = sbr.rel (0) target = $region61
    $region60: #{tpu_custom_call.1} parent=1 // pred_region
      %757 = dma.done [#allocation4], 32
    $region61: #{tpu_custom_call.1} parent=1 // pred_fallthru
      _
    %758 = vsyncpa [#allocation3], 1
    %759 = vsyncpa [#allocation6], 1
    %760 = vsyncpa [#allocation9], 1
    %761 = vsyncpa [#allocation4], 1

</llo_original>
